<compile_context>
chip_gen: v6e
topology: v6e:2x2x1
jax: 0.10.0
libtpu: 0.0.40
codegen_flags: <defaults>
</compile_context>

<pallas_src>
import functools

import jax
import jax.numpy as jnp
from jax import lax
from jax.experimental import pallas as pl
from jax.experimental.pallas import tpu as pltpu


def _round_up(x, m):
    return (x + m - 1) // m * m


def _ce_kernel(x_ref, t_ref, o_ref, *, scale, label_smooth):
    """One batch tile: scaled log-softmax + smoothed CE per-row loss.

    x_ref: (TB, C) logits tile; t_ref: (TB, 1) int32 targets (-1 = padded row);
    o_ref: (TB, 1) per-row loss for this tile (0 for padded rows).
    """
    x = x_ref[...].astype(jnp.float32) * scale             # (TB, C)
    tb, c = x.shape
    t = t_ref[...]                                          # (TB, 1) int32

    # numerically stable log-sum-exp along the class (lane) axis
    m = jnp.max(x, axis=1, keepdims=True)                   # (TB, 1)
    shifted = x - m
    lse = jnp.log(jnp.sum(jnp.exp(shifted), axis=1, keepdims=True))  # (TB, 1)

    # log-prob of the target class without materializing a one-hot:
    #   picked[r] = shifted[r, t[r]] - lse[r]
    class_ids = lax.broadcasted_iota(jnp.int32, (tb, c), 1)
    picked = jnp.sum(jnp.where(class_ids == t, shifted, 0.0),
                     axis=1, keepdims=True) - lse           # (TB, 1)

    if label_smooth > 0.0:
        # sum_c log_probs[r, c] = sum_c shifted[r, c] - C * lse[r]
        total = jnp.sum(shifted, axis=1, keepdims=True) - float(c) * lse
        per_row = -((1.0 - label_smooth) * picked
                    + (label_smooth / float(c)) * total)
    else:
        per_row = -picked

    valid = (t >= 0).astype(jnp.float32)                    # mask padded rows
    o_ref[...] = per_row * valid


def cross_entropy_loss(inputs, targets, *, scale=1.0, label_smooth=0.0,
                       tile_rows=None):
    """JAX/Pallas equivalent of CrossEntropyLoss.forward (default config:
    conf_penalty=None, no augmentation mixing)."""
    if inputs.shape[0] == 0:
        # matches the torch early-return for an empty batch
        return jnp.zeros([], dtype=inputs.dtype)

    b, c = inputs.shape
    itemsize = jnp.dtype(inputs.dtype).itemsize

    if tile_rows is None:
        # ~2 MiB per logits buffer -> ~4 MiB double-buffered: fits every
        # generation's scoped VMEM default with room to spare.
        budget = (2 * 1024 * 1024) // max(1, c * itemsize)
        tile_rows = max(8, min(1024, (budget // 8) * 8))
    tb = min(_round_up(int(tile_rows), 8), _round_up(b, 8))
    b_pad = _round_up(b, tb)
    g = b_pad // tb

    t = targets.astype(jnp.int32).reshape(b)
    x = inputs
    if b_pad != b:
        x = jnp.pad(x, ((0, b_pad - b), (0, 0)))
        t = jnp.pad(t, ((0, b_pad - b),), constant_values=-1)
    t2d = t.reshape(b_pad, 1)
    # TODO(synk): for vocab-scale C, also tile the class axis with an online
    # (running-max) logsumexp; current version assumes a full-C row fits VMEM.

    cost = pl.CostEstimate(
        flops=6 * b_pad * c,
        transcendentals=b_pad * c + b_pad,
        bytes_accessed=b_pad * c * itemsize + 2 * b_pad * 4,
    )

    per_row = pl.pallas_call(
        functools.partial(_ce_kernel, scale=float(scale),
                          label_smooth=float(label_smooth)),
        out_shape=jax.ShapeDtypeStruct((b_pad, 1), jnp.float32),
        grid=(g,),
        in_specs=[
            pl.BlockSpec((tb, c), lambda i: (i, 0)),   # logits: batch tile, full C
            pl.BlockSpec((tb, 1), lambda i: (i, 0)),   # target indices
        ],
        out_specs=pl.BlockSpec((tb, 1), lambda i: (i, 0)),  # per-row loss
        compiler_params=pltpu.CompilerParams(
            dimension_semantics=("parallel",)),
        cost_estimate=cost,
    )(x, t2d)

    loss = jnp.sum(per_row) / jnp.float32(b)
    # TODO(synk): conf_penalty / aug-mixing branches (data-dependent filtering
    # `losses[losses > 0]`) not implemented; defaults in __init__ skip them.
    return loss.astype(inputs.dtype)


if __name__ == "__main__":
    key = jax.random.PRNGKey(0)
    k1, k2, k3, k4 = jax.random.split(key, 4)

    def ref_loss(x, t, scale, ls):
        lp = jax.nn.log_softmax(scale * x, axis=1)
        oh = jax.nn.one_hot(t, x.shape[1], dtype=jnp.float32)
        tgt = (1.0 - ls) * oh + ls / x.shape[1] if ls > 0 else oh
        return jnp.mean(jnp.sum(-tgt * lp, axis=1))

    # case 1: label smoothing, single tile
    b1, c1 = 8, 32
    x1 = jax.random.normal(k1, (b1, c1), dtype=jnp.float32)
    t1 = jax.random.randint(k2, (b1,), 0, c1, dtype=jnp.int32)
    o1 = jax.block_until_ready(cross_entropy_loss(x1, t1, scale=1.0,
                                                  label_smooth=0.1))
    assert jnp.allclose(o1, ref_loss(x1, t1, 1.0, 0.1), atol=1e-5, rtol=1e-5), o1

    # case 2: batch not a multiple of 8 (padding/masking), no smoothing, scale
    b2, c2 = 6, 160
    x2 = jax.random.normal(k3, (b2, c2), dtype=jnp.float32)
    t2 = jax.random.randint(k4, (b2,), 0, c2, dtype=jnp.int32)
    o2 = jax.block_until_ready(cross_entropy_loss(x2, t2, scale=0.5,
                                                  label_smooth=0.0))
    assert jnp.allclose(o2, ref_loss(x2, t2, 0.5, 0.0), atol=1e-5, rtol=1e-5), o2

    # case 3: multi-tile grid (parallel per-tile blocks)
    b3, c3 = 24, 32
    x3 = jax.random.normal(k1, (b3, c3), dtype=jnp.float32)
    t3 = jax.random.randint(k2, (b3,), 0, c3, dtype=jnp.int32)
    o3 = jax.block_until_ready(cross_entropy_loss(x3, t3, scale=1.0,
                                                  label_smooth=0.1, tile_rows=8))
    assert jnp.allclose(o3, ref_loss(x3, t3, 1.0, 0.1), atol=1e-5, rtol=1e-5), o3

    print("KERNEL_OK")
</pallas_src>

<mosaic_0001>
module attributes {stable_mosaic.version = 11 : i64} {
  func.func @_ce_kernel(%arg0: i32, %arg1: memref<8x32xf32, #tpu.memory_space<vmem>>, %arg2: memref<8x1xi32, #tpu.memory_space<vmem>>, %arg3: memref<8x1xf32, #tpu.memory_space<vmem>>) attributes {dimension_semantics = [#tpu.dimension_semantics<parallel>], iteration_bounds = array<i64: 1>, scalar_prefetch = 0 : i64, scratch_operands = 0 : i64, tpu.core_type = #tpu.core_type<tc>, window_params = [{transform_indices = @transform_0, window_bounds = array<i64: 8, 32>}, {transform_indices = @transform_1, window_bounds = array<i64: 8, 1>}, {transform_indices = @transform_2, window_bounds = array<i64: 8, 1>}]} {
    %c0 = arith.constant 0 : index
    %c0_0 = arith.constant 0 : index
    %0 = vector.load %arg1[%c0, %c0_0] : memref<8x32xf32, #tpu.memory_space<vmem>>, vector<8x32xf32>
    %cst = arith.constant 1.000000e+00 : f32
    %1 = vector.broadcast %cst : f32 to vector<8x32xf32>
    %2 = arith.mulf %0, %1 : vector<8x32xf32>
    %c0_1 = arith.constant 0 : index
    %c0_2 = arith.constant 0 : index
    %3 = vector.load %arg2[%c0_1, %c0_2] : memref<8x1xi32, #tpu.memory_space<vmem>>, vector<8x1xi32>
    %cst_3 = arith.constant dense<0xFF800000> : vector<8xf32>
    %4 = vector.multi_reduction <maximumf>, %2, %cst_3 [1] : vector<8x32xf32> to vector<8xf32>
    %5 = vector.shape_cast %4 : vector<8xf32> to vector<8x1xf32>
    %6 = vector.broadcast %5 : vector<8x1xf32> to vector<8x32xf32>
    %7 = arith.subf %2, %6 : vector<8x32xf32>
    %8 = math.exp %7 : vector<8x32xf32>
    %cst_4 = arith.constant dense<0.000000e+00> : vector<8xf32>
    %9 = vector.multi_reduction <add>, %8, %cst_4 [1] : vector<8x32xf32> to vector<8xf32>
    %10 = vector.shape_cast %9 : vector<8xf32> to vector<8x1xf32>
    %11 = math.log %10 : vector<8x1xf32>
    %12 = tpu.iota {dimensions = array<i32: 1>} : vector<8x32xi32>
    %13 = vector.broadcast %3 : vector<8x1xi32> to vector<8x32xi32>
    %14 = arith.cmpi eq, %12, %13 : vector<8x32xi32>
    %cst_5 = arith.constant 0.000000e+00 : f32
    %15 = vector.broadcast %cst_5 : f32 to vector<8x32xf32>
    %16 = arith.select %14, %7, %15 : vector<8x32xi1>, vector<8x32xf32>
    %cst_6 = arith.constant dense<0.000000e+00> : vector<8xf32>
    %17 = vector.multi_reduction <add>, %16, %cst_6 [1] : vector<8x32xf32> to vector<8xf32>
    %18 = vector.shape_cast %17 : vector<8xf32> to vector<8x1xf32>
    %19 = arith.subf %18, %11 : vector<8x1xf32>
    %cst_7 = arith.constant dense<0.000000e+00> : vector<8xf32>
    %20 = vector.multi_reduction <add>, %7, %cst_7 [1] : vector<8x32xf32> to vector<8xf32>
    %21 = vector.shape_cast %20 : vector<8xf32> to vector<8x1xf32>
    %cst_8 = arith.constant 3.200000e+01 : f32
    %22 = vector.broadcast %cst_8 : f32 to vector<8x1xf32>
    %23 = arith.mulf %22, %11 : vector<8x1xf32>
    %24 = arith.subf %21, %23 : vector<8x1xf32>
    %cst_9 = arith.constant 0.899999976 : f32
    %25 = vector.broadcast %cst_9 : f32 to vector<8x1xf32>
    %26 = arith.mulf %25, %19 : vector<8x1xf32>
    %cst_10 = arith.constant 3.125000e-03 : f32
    %27 = vector.broadcast %cst_10 : f32 to vector<8x1xf32>
    %28 = arith.mulf %27, %24 : vector<8x1xf32>
    %29 = arith.addf %26, %28 : vector<8x1xf32>
    %cst_11 = arith.constant 0.000000e+00 : f32
    %30 = vector.broadcast %cst_11 : f32 to vector<8x1xf32>
    %31 = arith.subf %30, %29 : vector<8x1xf32>
    %c0_i32 = arith.constant 0 : i32
    %32 = vector.broadcast %c0_i32 : i32 to vector<8x1xi32>
    %33 = arith.cmpi sge, %3, %32 : vector<8x1xi32>
    %34 = arith.extui %33 : vector<8x1xi1> to vector<8x1xi32>
    %35 = arith.sitofp %34 : vector<8x1xi32> to vector<8x1xf32>
    %36 = arith.mulf %31, %35 : vector<8x1xf32>
    %c0_12 = arith.constant 0 : index
    %c0_13 = arith.constant 0 : index
    %37 = vector.load %arg3[%c0_12, %c0_13] : memref<8x1xf32, #tpu.memory_space<vmem>>, vector<8x1xf32>
    tpu.vector_store %arg3[%c0_12, %c0_13], %36 {strides = array<i32>} : memref<8x1xf32, #tpu.memory_space<vmem>>, vector<8x1xf32>,
    return
  }
  func.func @transform_0(%arg0: i32) -> (i32, i32) {
    %c0_i32 = arith.constant 0 : i32
    %c0_i32_0 = arith.constant 0 : i32
    return %arg0, %c0_i32 : i32, i32
  }
  func.func @transform_1(%arg0: i32) -> (i32, i32) {
    %c0_i32 = arith.constant 0 : i32
    %c0_i32_0 = arith.constant 0 : i32
    return %arg0, %c0_i32 : i32, i32
  }
  func.func @transform_2(%arg0: i32) -> (i32, i32) {
    %c0_i32 = arith.constant 0 : i32
    %c0_i32_0 = arith.constant 0 : i32
    return %arg0, %c0_i32 : i32, i32
  }
}

</mosaic_0001>

<llo_original>
// kernel: tpu_custom_call.1
$region0: #{tpu_custom_call.1}
  #allocation0 [shape = 'u32[]', space=smem, size = 0x4, offset = 0x4, fixed_abs, tag = 'smem constant byte address 0x4 - core index']
  #allocation1 [shape = 'u32[144,128]{1,0:T(1,128)}', space=vmem, size = 0x12000, scoped, tag = 'internal scratch']
  %s0 = inlined_call_operand.vmem [shape: f32[8,32], index: 0, kind: input, shape index: {}]
  %s1 = inlined_call_operand.vmem [shape: s32[8,1], index: 1, kind: input, shape index: {}]
  %s2 = inlined_call_operand.vmem [shape: f32[8,1], index: 2, kind: output, shape index: {}]
  %s3 = sld [smem:[#allocation0]]
  $region18: #{tpu_custom_call.1} parent=0
    _
  %s5 = ssub.s32 1, %s3
  %s6 = scalar_select 0, %s5, %s3
  // Predicated region
  $region2: #{tpu_custom_call.1} parent=0 // pred_check
    _
  $region3: #{tpu_custom_call.1} parent=0 // pred_check_branch
    %8 = sbr.rel (0) target = $region5
  $region4: #{tpu_custom_call.1} parent=0 // pred_region
    _
  $region5: #{tpu_custom_call.1} parent=0 // pred_fallthru
    _
  // Predicated region
  $region6: #{tpu_custom_call.1} parent=0 // pred_check
    _
  $region7: #{tpu_custom_call.1} parent=0 // pred_check_branch
    %10 = sbr.rel (0) target = $region9
  $region8: #{tpu_custom_call.1} parent=0 // pred_region
    _
  $region9: #{tpu_custom_call.1} parent=0 // pred_fallthru
    _
  %v11 = vld [vmem:[%s0] sm:$0xff]
  %v12 = vld [vmem:[%s1] sm:$0xff]
  %vm13 = vcmask 261120
  %v14 = vsel %vm13, %v11, -inf
  %15 = vmax.xlane.f32.xlu0 %v14
  %v16 = vpop.xlane.xlu0 %15
  %v17 = vsub.f32 %v11, %v16
  %v18 = vmul.f32 %v17, 1.442695
  %v19 = vpow.pop %v18
  %v20 = vsel %vm13, %v19, 0.0
  %21 = vadd.xlane.f32.xlu0 %v20
  %v22 = vpop.xlane.xlu0 %21
  %v23 = vlog2.pop %v22
  %v24 = vmul.f32 %v23, 0.6931472
  %v25 = vlaneseq
  %v26 = vand.u32 %v25, 127
  %27 = vset.pattern.permute.xlu0 0
  %28 = vperm.xlu0 %27, %v12
  %v29 = vpop.permute.xlu0 %28
  %vm30 = vcmp.eq.s32.totalorder %v26, %v29
  %v31 = vsel %vm30, %v17, 0.0
  %v32 = vsel %vm13, %v31, 0.0
  %33 = vadd.xlane.f32.xlu0 %v32
  %v34 = vpop.xlane.xlu0 %33
  %v35 = vsub.f32 %v34, %v24
  %v36 = vsel %vm13, %v17, 0.0
  %37 = vadd.xlane.f32.xlu0 %v36
  %v38 = vpop.xlane.xlu0 %37
  %v39 = vmul.f32 %v24, 32.0
  %v40 = vsub.f32 %v38, %v39
  %v41 = vmul.f32 %v35, 0.9
  %v42 = vmul.f32 %v40, 0.003125
  %v43 = vadd.f32 %v41, %v42
  %v44 = vsub.f32 0.0, %v43
  %vm45 = vcmp.ge.s32.totalorder %v12, 0
  %v46 = vsel %vm45, 1, 0
  %v47 = vcvt.s32.f32 %v46
  %v48 = vmul.f32 %v44, %v47
  %vm49 = vcmask 7168
  %50 = vst.msk [vmem:[%s2] sm:$0xff] %vm49, %v48
  // Predicated region
  $region10: #{tpu_custom_call.1} parent=0 // pred_check
    _
  $region11: #{tpu_custom_call.1} parent=0 // pred_check_branch
    %52 = sbr.rel (0) target = $region13
  $region12: #{tpu_custom_call.1} parent=0 // pred_region
    _
  $region13: #{tpu_custom_call.1} parent=0 // pred_fallthru
    _
  // Predicated region
  $region14: #{tpu_custom_call.1} parent=0 // pred_check
    _
  $region15: #{tpu_custom_call.1} parent=0 // pred_check_branch
    %54 = sbr.rel (0) target = $region17
  $region16: #{tpu_custom_call.1} parent=0 // pred_region
    _
  $region17: #{tpu_custom_call.1} parent=0 // pred_fallthru
    _

</llo_original>
